<compile_context>
chip_gen: v7x
topology: tpu7x:2x2x1
jax: 0.10.0
libtpu: 0.0.40
codegen_flags: <defaults>
</compile_context>

<pallas_src>
import jax
import jax.numpy as jnp
from jax import lax
from jax.experimental import pallas as pl
from jax.experimental.pallas import tpu as pltpu


# --------------------------------------------------------------------------
# Hardware-aware sizing helpers.
# --------------------------------------------------------------------------
def _vmem_capacity_bytes():
    try:
        info = pltpu.get_tpu_info()
        cap = getattr(info, "vmem_capacity_bytes", None)
        if cap:
            return int(cap)
    except Exception:
        pass
    return 64 * 1024 * 1024  # conservative default (v7x per-core VMEM)


def _select_tile(l_valid, c_in, c_out, K, conv_bytes, out_bytes, budget):
    """Largest pooled-tile width T (multiple of 128) whose working set fits."""
    H = K // 2
    KC = K * c_in

    def need(t):
        th = t + H
        return (2 * 2 * c_in * th * conv_bytes      # double-buffered input tile
                + 2 * c_out * t * out_bytes         # double-buffered output tile
                + c_out * KC * conv_bytes           # resident weights
                + 3 * KC * 2 * t * conv_bytes       # in-kernel (KC, 2T) operand + temps
                + 2 * c_out * 2 * t * 4)            # f32 conv tile + epilogue temps

    best = 128
    for t in (1024, 512, 256, 128):
        if need(t) <= budget:
            best = t
            break
    cap = max(128, ((l_valid + 127) // 128) * 128)  # no point exceeding the row
    t = min(best, cap)
    return t, need(t)


# --------------------------------------------------------------------------
# Forward pass.
# --------------------------------------------------------------------------
def sandwich_forward(x, w, b, gamma, beta, filter_size, *,
                     eps=1e-5, conv_dtype=jnp.bfloat16):
    """x: (N, c_in, L) -> (N, c_out, L_out).  Matches PyTorch training-mode fwd."""
    N, c_in, L = x.shape
    c_out = w.shape[0]
    K = int(filter_size)
    assert 1 <= K <= 128, "unreasonable filter size"
    pad = (K - 1) // 2
    L_conv = L + 2 * pad - K + 1
    L_out = L_conv // 2
    assert L_out >= 1, "sequence too short for MaxPool1d(2, 2)"
    r = L_conv - 2 * L_out          # 1 iff the conv has a trailing column MaxPool drops
    H = K // 2                      # halo (in pooled-position units) needed by the taps
    KC = K * c_in

    conv_bytes = jnp.dtype(conv_dtype).itemsize
    out_bytes = jnp.dtype(x.dtype).itemsize

    vmem_cap = _vmem_capacity_bytes()
    vmem_limit_cap = (vmem_cap * 3) // 4
    T, tile_need = _select_tile(L_out + r, c_in, c_out, K, conv_bytes, out_bytes,
                                budget=(vmem_limit_cap * 3) // 4)
    vmem_limit = int(min(vmem_limit_cap, max(32 * 1024 * 1024, 2 * tile_need)))

    # L_out + r even columns must be visible to pass 1 (BN statistics include the
    # trailing conv column even though MaxPool drops it).
    L_out_p = pl.cdiv(L_out + r, T) * T
    num_j = L_out_p // T
    TH = T + H
    S = N * num_j

    # ---- wrapper glue (all ~|x|-sized, conv_dtype-wide) ---------------------
    # Cast FIRST so every intermediate below is half-width when conv_dtype=bf16.
    x_c = x.astype(conv_dtype)
    Lh_alloc = (num_j + 1) * T              # even/odd row length incl. slack for halo
    need_len = 2 * Lh_alloc
    right_pad = need_len - L - pad
    assert right_pad >= pad
    x_ext = jnp.pad(x_c, ((0, 0), (0, 0), (pad, right_pad)))      # (N, c_in, need_len)

    even = x_ext[:, :, 0::2]                                       # e[t] = x_pad[2t]
    odd = x_ext[:, :, 1::2]                                        # o[t] = x_pad[2t+1]
    arr = jnp.stack([even, odd], axis=1)                           # (N, 2, c_in, Lh_alloc)
    body = arr[:, :, :, :num_j * T].reshape(N, 2, c_in, num_j, T)
    if H > 0:
        halo = arr[:, :, :, T:(num_j + 1) * T].reshape(N, 2, c_in, num_j, T)[..., :H]
        tiles5 = jnp.concatenate([body, halo], axis=-1)            # (N, 2, c_in, num_j, TH)
    else:
        tiles5 = body
    # (S, 2, c_in, TH), row s = n*num_j + j
    tiles = jnp.transpose(tiles5, (0, 3, 1, 2, 4)).reshape(S, 2, c_in, TH)

    # w2[o, k*c_in + c] = w[o, c, k]
    w2_f32 = jnp.transpose(w, (0, 2, 1)).reshape(c_out, KC).astype(jnp.float32)
    w2_c = w2_f32.astype(conv_dtype)

    # ---- in-kernel im2col from the haloed even/odd tile ---------------------
    def build_x(x_eo):
        """x_eo: (2, c_in, TH) -> (K*c_in, 2T).  Lanes [0,T) = even conv
        positions, lanes [T,2T) = odd conv positions."""
        e = x_eo[0]
        o = x_eo[1]
        rows = []
        for k in range(K):
            if k % 2 == 0:
                ev = e[:, k // 2:k // 2 + T]
                od = o[:, k // 2:k // 2 + T]
            else:
                ev = o[:, k // 2:k // 2 + T]
                od = e[:, (k + 1) // 2:(k + 1) // 2 + T]
            rows.append(jnp.concatenate([ev, od], axis=1))         # (c_in, 2T)
        return rows[0] if K == 1 else jnp.concatenate(rows, axis=0)

    nsplit = 2 if S % 2 == 0 else 1
    per_split = S // nsplit

    # ---- pass 1: per-channel sum / sum-of-squares of the (bias-free) conv ---
    def stats_kernel(x_ref, w_ref, sum_ref, ssq_ref):
        @pl.when(pl.program_id(1) == 0)
        def _():
            sum_ref[...] = jnp.zeros_like(sum_ref)
            ssq_ref[...] = jnp.zeros_like(ssq_ref)

        X = build_x(x_ref[0])
        y = jnp.dot(w_ref[...], X, preferred_element_type=jnp.float32)  # (c_out, 2T)

        s_idx = pl.program_id(0) * per_split + pl.program_id(1)
        j = s_idx % num_j
        col = lax.broadcasted_iota(jnp.int32, (1, T), 1) + j * T
        ye = jnp.where(col < (L_out + r), y[:, :T], 0.0)   # even cols: incl. trailing col
        yo = jnp.where(col < L_out, y[:, T:], 0.0)         # odd cols
        sum_ref[...] += jnp.sum(ye + yo, axis=1, keepdims=True)
        ssq_ref[...] += jnp.sum(ye * ye + yo * yo, axis=1, keepdims=True)

    conv_sum, conv_ssq = pl.pallas_call(
        stats_kernel,
        out_shape=(jax.ShapeDtypeStruct((nsplit, c_out, 1), jnp.float32),
                   jax.ShapeDtypeStruct((nsplit, c_out, 1), jnp.float32)),
        grid_spec=pltpu.PrefetchScalarGridSpec(
            num_scalar_prefetch=0,
            grid=(nsplit, per_split),
            in_specs=[
                pl.BlockSpec((1, 2, c_in, TH),
                             lambda g, tt: (g * per_split + tt, 0, 0, 0)),
                pl.BlockSpec((c_out, KC), lambda g, tt: (0, 0)),
            ],
            out_specs=(pl.BlockSpec((1, c_out, 1), lambda g, tt: (g, 0, 0)),
                       pl.BlockSpec((1, c_out, 1), lambda g, tt: (g, 0, 0))),
        ),
        compiler_params=pltpu.CompilerParams(
            dimension_semantics=("parallel", "arbitrary"),
            vmem_limit_bytes=vmem_limit),
    )(tiles, w2_c)

    s = jnp.sum(conv_sum[:, :, 0], axis=0)
    ss = jnp.sum(conv_ssq[:, :, 0], axis=0)

    count = jnp.float32(N * L_conv)
    mean_raw = s / count                       # batch mean of the bias-free conv
    # NOTE: E[x^2]-E[x]^2 in f32; acceptable here, revisit if tolerances tighten.
    var = jnp.maximum(ss / count - mean_raw * mean_raw, 0.0)
    scale = gamma * lax.rsqrt(var + eps)
    shift = beta - mean_raw * scale            # conv bias cancels: (conv+b) - (mean_raw+b)

    # Fold the BN scale into the pass-2 weights (tiny one-off rescale).
    w2_scaled = (w2_f32 * scale[:, None]).astype(conv_dtype)
    shift2d = shift.reshape(c_out, 1).astype(jnp.float32)

    # ---- pass 2: conv -> (+shift) -> ReLU -> MaxPool(2, 2) ------------------
    def fwd_kernel(x_ref, w_ref, shift_ref, o_ref):
        X = build_x(x_ref[0])
        y = jnp.dot(w_ref[...], X, preferred_element_type=jnp.float32)  # (c_out, 2T)
        y = jnp.maximum(y + shift_ref[...], 0.0)
        o_ref[0] = jnp.maximum(y[:, :T], y[:, T:]).astype(o_ref.dtype)

    out_full = pl.pallas_call(
        fwd_kernel,
        out_shape=jax.ShapeDtypeStruct((N, c_out, L_out_p), x.dtype),
        grid_spec=pltpu.PrefetchScalarGridSpec(
            num_scalar_prefetch=0,
            grid=(N, num_j),
            in_specs=[
                pl.BlockSpec((1, 2, c_in, TH),
                             lambda n, jj: (n * num_j + jj, 0, 0, 0)),
                pl.BlockSpec((c_out, KC), lambda n, jj: (0, 0)),
                pl.BlockSpec((c_out, 1), lambda n, jj: (0, 0)),
            ],
            out_specs=pl.BlockSpec((1, c_out, T), lambda n, jj: (n, 0, jj)),
        ),
        compiler_params=pltpu.CompilerParams(
            dimension_semantics=("parallel", "parallel"),
            vmem_limit_bytes=vmem_limit),
    )(tiles, w2_scaled, shift2d)

    return out_full[:, :, :L_out] if L_out_p != L_out else out_full


# --------------------------------------------------------------------------
# Pure-JAX reference matching the PyTorch forward (training-mode BN).
# --------------------------------------------------------------------------
def _reference(x, w, b, gamma, beta, K):
    N, c_in, L = x.shape
    c_out = w.shape[0]
    pad = (K - 1) // 2
    xp = jnp.pad(x, ((0, 0), (0, 0), (pad, pad)))
    L_conv = xp.shape[2] - K + 1
    conv = jnp.zeros((N, c_out, L_conv), jnp.float32)
    for k in range(K):
        conv = conv + jnp.einsum('oi,nil->nol', w[:, :, k], xp[:, :, k:k + L_conv])
    conv = conv + b[None, :, None]
    mean = conv.mean(axis=(0, 2), keepdims=True)
    var = ((conv - mean) ** 2).mean(axis=(0, 2), keepdims=True)
    y = (conv - mean) / jnp.sqrt(var + 1e-5)
    y = y * gamma[None, :, None] + beta[None, :, None]
    y = jnp.maximum(y, 0.0)
    L_out = L_conv // 2
    return jnp.maximum(y[:, :, 0:2 * L_out:2], y[:, :, 1:2 * L_out:2])


if __name__ == "__main__":
    key = jax.random.PRNGKey(0)
    k1, k2, k3, k4, k5, k6 = jax.random.split(key, 6)

    def make_params(kw, kb, c_in, c_out, K):
        bound = 1.0 / (c_in * K) ** 0.5
        w = jax.random.uniform(kw, (c_out, c_in, K), jnp.float32, -bound, bound)
        b = jax.random.uniform(kb, (c_out,), jnp.float32, -bound, bound)
        return w, b, jnp.ones((c_out,), jnp.float32), jnp.zeros((c_out,), jnp.float32)

    # Case 1: odd filter, even conv length (original example shapes).
    N, c_in, c_out, L, K = 2, 4, 8, 16, 3
    x = jax.random.normal(k1, (N, c_in, L), dtype=jnp.float32)
    w, b, gamma, beta = make_params(k2, k3, c_in, c_out, K)

    ref = _reference(x, w, b, gamma, beta, K)

    out_f32 = jax.block_until_ready(
        sandwich_forward(x, w, b, gamma, beta, K, conv_dtype=jnp.float32))
    assert out_f32.shape == ref.shape == (N, c_out, L // 2), out_f32.shape
    assert jnp.allclose(out_f32, ref, atol=1e-4, rtol=1e-4), (
        float(jnp.max(jnp.abs(out_f32 - ref))))

    # Default path (bf16 matmul inputs, f32 accumulation): looser tolerance.
    out_bf = jax.block_until_ready(sandwich_forward(x, w, b, gamma, beta, K))
    assert out_bf.shape == ref.shape
    assert jnp.allclose(out_bf, ref, atol=1e-1, rtol=1e-1), (
        float(jnp.max(jnp.abs(out_bf - ref))))

    # Case 2: even filter, odd conv length (BatchNorm sees the trailing column
    # that MaxPool drops), ragged channel counts.
    N, c_in, c_out, L, K = 2, 3, 5, 20, 4
    x = jax.random.normal(k4, (N, c_in, L), dtype=jnp.float32)
    w, b, gamma, beta = make_params(k5, k6, c_in, c_out, K)
    ref = _reference(x, w, b, gamma, beta, K)
    out2 = jax.block_until_ready(
        sandwich_forward(x, w, b, gamma, beta, K, conv_dtype=jnp.float32))
    assert out2.shape == ref.shape, (out2.shape, ref.shape)
    assert jnp.allclose(out2, ref, atol=1e-4, rtol=1e-4), (
        float(jnp.max(jnp.abs(out2 - ref))))

    print("KERNEL_OK")
</pallas_src>

<mosaic_0001>
module attributes {stable_mosaic.version = 11 : i64} {
  func.func @stats_kernel(%arg0: i32, %arg1: i32, %arg2: memref<1x2x4x129xf32, #tpu.memory_space<vmem>>, %arg3: memref<8x12xf32, #tpu.memory_space<vmem>>, %arg4: memref<1x8x1xf32, #tpu.memory_space<vmem>>, %arg5: memref<1x8x1xf32, #tpu.memory_space<vmem>>) attributes {dimension_semantics = [#tpu.dimension_semantics<parallel>, #tpu.dimension_semantics<arbitrary>], iteration_bounds = array<i64: 2, 1>, scalar_prefetch = 0 : i64, scratch_operands = 0 : i64, tpu.core_type = #tpu.core_type<tc>, window_params = [{transform_indices = @transform_0, window_bounds = array<i64: 1, 2, 4, 129>}, {pipeline_mode = #tpu.pipeline_mode<synchronous>, transform_indices = @transform_1, window_bounds = array<i64: 8, 12>}, {transform_indices = @transform_2, window_bounds = array<i64: 1, 8, 1>}, {transform_indices = @transform_3, window_bounds = array<i64: 1, 8, 1>}]} {
    %c0_i32 = arith.constant 0 : i32
    %0 = arith.cmpi eq, %arg1, %c0_i32 : i32
    %1 = arith.extui %0 : i1 to i32
    %c0_i32_0 = arith.constant 0 : i32
    %2 = arith.cmpi ne, %1, %c0_i32_0 : i32
    scf.if %2 {
      %cst_29 = arith.constant 0.000000e+00 : f32
      %67 = vector.broadcast %cst_29 : f32 to vector<1x8x1xf32>
      %c0_30 = arith.constant 0 : index
      %c0_31 = arith.constant 0 : index
      %c0_32 = arith.constant 0 : index
      %68 = vector.load %arg4[%c0_30, %c0_31, %c0_32] : memref<1x8x1xf32, #tpu.memory_space<vmem>>, vector<1x8x1xf32>
      tpu.vector_store %arg4[%c0_30, %c0_31, %c0_32], %67 {strides = array<i32>} : memref<1x8x1xf32, #tpu.memory_space<vmem>>, vector<1x8x1xf32>,
      %cst_33 = arith.constant 0.000000e+00 : f32
      %69 = vector.broadcast %cst_33 : f32 to vector<1x8x1xf32>
      %c0_34 = arith.constant 0 : index
      %c0_35 = arith.constant 0 : index
      %c0_36 = arith.constant 0 : index
      %70 = vector.load %arg5[%c0_34, %c0_35, %c0_36] : memref<1x8x1xf32, #tpu.memory_space<vmem>>, vector<1x8x1xf32>
      tpu.vector_store %arg5[%c0_34, %c0_35, %c0_36], %69 {strides = array<i32>} : memref<1x8x1xf32, #tpu.memory_space<vmem>>, vector<1x8x1xf32>,
    } else {
    }
    %c0 = arith.constant 0 : index
    %c0_1 = arith.constant 0 : index
    %c0_2 = arith.constant 0 : index
    %c0_3 = arith.constant 0 : index
    %3 = vector.load %arg2[%c0, %c0_1, %c0_2, %c0_3] : memref<1x2x4x129xf32, #tpu.memory_space<vmem>>, vector<1x2x4x129xf32>
    %4 = vector.shape_cast %3 : vector<1x2x4x129xf32> to vector<2x4x129xf32>
    %5 = vector.extract_strided_slice %4 {offsets = [0, 0, 0], sizes = [1, 4, 129], strides = [1, 1, 1]} : vector<2x4x129xf32> to vector<1x4x129xf32>
    %6 = vector.shape_cast %5 : vector<1x4x129xf32> to vector<4x129xf32>
    %7 = vector.extract_strided_slice %4 {offsets = [1, 0, 0], sizes = [1, 4, 129], strides = [1, 1, 1]} : vector<2x4x129xf32> to vector<1x4x129xf32>
    %8 = vector.shape_cast %7 : vector<1x4x129xf32> to vector<4x129xf32>
    %9 = vector.extract_strided_slice %6 {offsets = [0, 0], sizes = [4, 128], strides = [1, 1]} : vector<4x129xf32> to vector<4x128xf32>
    %10 = vector.extract_strided_slice %8 {offsets = [0, 0], sizes = [4, 128], strides = [1, 1]} : vector<4x129xf32> to vector<4x128xf32>
    %11 = tpu.concatenate %9, %10 in 1 : vector<4x128xf32>, vector<4x128xf32> -> vector<4x256xf32>
    %12 = vector.extract_strided_slice %8 {offsets = [0, 0], sizes = [4, 128], strides = [1, 1]} : vector<4x129xf32> to vector<4x128xf32>
    %13 = vector.extract_strided_slice %6 {offsets = [0, 1], sizes = [4, 128], strides = [1, 1]} : vector<4x129xf32> to vector<4x128xf32>
    %14 = tpu.concatenate %12, %13 in 1 : vector<4x128xf32>, vector<4x128xf32> -> vector<4x256xf32>
    %15 = vector.extract_strided_slice %6 {offsets = [0, 1], sizes = [4, 128], strides = [1, 1]} : vector<4x129xf32> to vector<4x128xf32>
    %16 = vector.extract_strided_slice %8 {offsets = [0, 1], sizes = [4, 128], strides = [1, 1]} : vector<4x129xf32> to vector<4x128xf32>
    %17 = tpu.concatenate %15, %16 in 1 : vector<4x128xf32>, vector<4x128xf32> -> vector<4x256xf32>
    %18 = tpu.concatenate %11, %14, %17 in 0 : vector<4x256xf32>, vector<4x256xf32>, vector<4x256xf32> -> vector<12x256xf32>
    %c0_4 = arith.constant 0 : index
    %c0_5 = arith.constant 0 : index
    %19 = vector.load %arg3[%c0_4, %c0_5] : memref<8x12xf32, #tpu.memory_space<vmem>>, vector<8x12xf32>
    %cst = arith.constant dense<0.000000e+00> : vector<8x256xf32>
    %20 = tpu.matmul %19, %18, %cst {dimension_numbers = #tpu.dot_dimension_numbers<[1], [0], [0], [1], [0, 0, 1, 1], [], []>} : vector<8x12xf32>, vector<12x256xf32>, vector<8x256xf32> -> vector<8x256xf32>
    %c1_i32 = arith.constant 1 : i32
    %21 = arith.muli %arg0, %c1_i32 : i32
    %22 = arith.addi %21, %arg1 : i32
    %c1_i32_6 = arith.constant 1 : i32
    %c0_i32_7 = arith.constant 0 : i32
    %23 = arith.cmpi eq, %c1_i32_6, %c0_i32_7 : i32
    %c1_i32_8 = arith.constant 1 : i32
    %24 = arith.select %23, %c1_i32_8, %c1_i32_6 : i32
    %25 = arith.remsi %22, %24 : i32
    %c0_i32_9 = arith.constant 0 : i32
    %26 = arith.cmpi ne, %25, %c0_i32_9 : i32
    %c0_i32_10 = arith.constant 0 : i32
    %27 = arith.cmpi slt, %25, %c0_i32_10 : i32
    %c0_i32_11 = arith.constant 0 : i32
    %28 = arith.cmpi slt, %24, %c0_i32_11 : i32
    %29 = arith.xori %27, %28 : i1
    %30 = arith.andi %29, %26 : i1
    %31 = arith.addi %25, %24 : i32
    %32 = arith.select %30, %31, %25 : i32
    %33 = tpu.iota {dimensions = array<i32: 1>} : vector<1x128xi32>
    %c128_i32 = arith.constant 128 : i32
    %34 = arith.muli %32, %c128_i32 : i32
    %35 = vector.broadcast %34 : i32 to vector<1x128xi32>
    %36 = arith.addi %33, %35 : vector<1x128xi32>
    %c8_i32 = arith.constant 8 : i32
    %37 = vector.broadcast %c8_i32 : i32 to vector<1x128xi32>
    %38 = arith.cmpi slt, %36, %37 : vector<1x128xi32>
    %39 = vector.extract_strided_slice %20 {offsets = [0, 0], sizes = [8, 128], strides = [1, 1]} : vector<8x256xf32> to vector<8x128xf32>
    %cst_12 = arith.constant 0.000000e+00 : f32
    %40 = vector.shape_cast %38 : vector<1x128xi1> to vector<1x128xi1>
    %41 = vector.broadcast %40 : vector<1x128xi1> to vector<8x128xi1>
    %42 = vector.broadcast %cst_12 : f32 to vector<8x128xf32>
    %43 = arith.select %41, %39, %42 : vector<8x128xi1>, vector<8x128xf32>
    %c8_i32_13 = arith.constant 8 : i32
    %44 = vector.broadcast %c8_i32_13 : i32 to vector<1x128xi32>
    %45 = arith.cmpi slt, %36, %44 : vector<1x128xi32>
    %46 = vector.extract_strided_slice %20 {offsets = [0, 128], sizes = [8, 128], strides = [1, 1]} : vector<8x256xf32> to vector<8x128xf32>
    %cst_14 = arith.constant 0.000000e+00 : f32
    %47 = vector.shape_cast %45 : vector<1x128xi1> to vector<1x128xi1>
    %48 = vector.broadcast %47 : vector<1x128xi1> to vector<8x128xi1>
    %49 = vector.broadcast %cst_14 : f32 to vector<8x128xf32>
    %50 = arith.select %48, %46, %49 : vector<8x128xi1>, vector<8x128xf32>
    %c0_15 = arith.constant 0 : index
    %c0_16 = arith.constant 0 : index
    %c0_17 = arith.constant 0 : index
    %51 = vector.load %arg4[%c0_15, %c0_16, %c0_17] : memref<1x8x1xf32, #tpu.memory_space<vmem>>, vector<1x8x1xf32>
    %52 = arith.addf %43, %50 : vector<8x128xf32>
    %cst_18 = arith.constant dense<0.000000e+00> : vector<8xf32>
    %53 = vector.multi_reduction <add>, %52, %cst_18 [1] : vector<8x128xf32> to vector<8xf32>
    %54 = vector.shape_cast %53 : vector<8xf32> to vector<8x1xf32>
    %55 = vector.shape_cast %54 : vector<8x1xf32> to vector<1x8x1xf32>
    %56 = arith.addf %51, %55 : vector<1x8x1xf32>
    %c0_19 = arith.constant 0 : index
    %c0_20 = arith.constant 0 : index
    %c0_21 = arith.constant 0 : index
    %57 = vector.load %arg4[%c0_19, %c0_20, %c0_21] : memref<1x8x1xf32, #tpu.memory_space<vmem>>, vector<1x8x1xf32>
    tpu.vector_store %arg4[%c0_19, %c0_20, %c0_21], %56 {strides = array<i32>} : memref<1x8x1xf32, #tpu.memory_space<vmem>>, vector<1x8x1xf32>,
    %c0_22 = arith.constant 0 : index
    %c0_23 = arith.constant 0 : index
    %c0_24 = arith.constant 0 : index
    %58 = vector.load %arg5[%c0_22, %c0_23, %c0_24] : memref<1x8x1xf32, #tpu.memory_space<vmem>>, vector<1x8x1xf32>
    %59 = arith.mulf %43, %43 : vector<8x128xf32>
    %60 = arith.mulf %50, %50 : vector<8x128xf32>
    %61 = arith.addf %59, %60 : vector<8x128xf32>
    %cst_25 = arith.constant dense<0.000000e+00> : vector<8xf32>
    %62 = vector.multi_reduction <add>, %61, %cst_25 [1] : vector<8x128xf32> to vector<8xf32>
    %63 = vector.shape_cast %62 : vector<8xf32> to vector<8x1xf32>
    %64 = vector.shape_cast %63 : vector<8x1xf32> to vector<1x8x1xf32>
    %65 = arith.addf %58, %64 : vector<1x8x1xf32>
    %c0_26 = arith.constant 0 : index
    %c0_27 = arith.constant 0 : index
    %c0_28 = arith.constant 0 : index
    %66 = vector.load %arg5[%c0_26, %c0_27, %c0_28] : memref<1x8x1xf32, #tpu.memory_space<vmem>>, vector<1x8x1xf32>
    tpu.vector_store %arg5[%c0_26, %c0_27, %c0_28], %65 {strides = array<i32>} : memref<1x8x1xf32, #tpu.memory_space<vmem>>, vector<1x8x1xf32>,
    return
  }
  func.func @transform_0(%arg0: i32, %arg1: i32) -> (i32, i32, i32, i32) {
    %c1_i32 = arith.constant 1 : i32
    %0 = arith.muli %arg0, %c1_i32 : i32
    %1 = arith.addi %0, %arg1 : i32
    %c0_i32 = arith.constant 0 : i32
    %c0_i32_0 = arith.constant 0 : i32
    %c0_i32_1 = arith.constant 0 : i32
    %c0_i32_2 = arith.constant 0 : i32
    return %1, %c0_i32, %c0_i32_0, %c0_i32_1 : i32, i32, i32, i32
  }
  func.func @transform_1(%arg0: i32, %arg1: i32) -> (i32, i32) {
    %c0_i32 = arith.constant 0 : i32
    %c0_i32_0 = arith.constant 0 : i32
    %c0_i32_1 = arith.constant 0 : i32
    return %c0_i32, %c0_i32_0 : i32, i32
  }
  func.func @transform_2(%arg0: i32, %arg1: i32) -> (i32, i32, i32) {
    %c0_i32 = arith.constant 0 : i32
    %c0_i32_0 = arith.constant 0 : i32
    %c0_i32_1 = arith.constant 0 : i32
    return %arg0, %c0_i32, %c0_i32_0 : i32, i32, i32
  }
  func.func @transform_3(%arg0: i32, %arg1: i32) -> (i32, i32, i32) {
    %c0_i32 = arith.constant 0 : i32
    %c0_i32_0 = arith.constant 0 : i32
    %c0_i32_1 = arith.constant 0 : i32
    return %arg0, %c0_i32, %c0_i32_0 : i32, i32, i32
  }
}

</mosaic_0001>

<llo_original>
// kernel: tpu_custom_call.1
$region0: #{tpu_custom_call.1}
  #allocation0 [shape = 'u32[]', space=smem, size = 0x4, offset = 0x4, fixed_abs, tag = 'smem constant byte address 0x4 - core index']
  #allocation1 [shape = 'u32[144,128]{1,0:T(1,128)}', space=vmem, size = 0x12000, scoped, tag = 'internal scratch']
  %s0 = inlined_call_operand.hbm [shape: f32[2,2,4,129], index: 0, kind: input, shape index: {}]
  %s1 = inlined_call_operand.hbm [shape: f32[8,12], index: 1, kind: input, shape index: {}]
  %s2 = inlined_call_operand.vmem [shape: f32[2,8,1], index: 2, kind: output, shape index: {0}]
  %s3 = inlined_call_operand.vmem [shape: f32[2,8,1], index: 3, kind: output, shape index: {1}]
  %4 = xla_tuple %s2, %s3
  %s5 = sld [smem:[#allocation0]]
  $region61: #{tpu_custom_call.1} parent=0
    _
  %s7 = ssub.s32 1, %s5
  %s8 = scalar_select 0, %s7, %s5
  $region1: #{tpu_custom_call.1} parent=0
    #allocation2 [shape = 'u8[16384]{0}', space=vmem, size = 0x4000, scoped, tag = 'input window, operand 0']
    #allocation3 [shape = 's32[2]{0}', space=sflag, size = 0x8, scoped, tag = 'scoped memory for tpu_custom_call.1']
    #allocation4 [shape = 'u8[4096]{0}', space=vmem, size = 0x1000, scoped, tag = 'input window, operand 1, single buffered']
    #allocation5 [shape = 's32[1]{0}', space=sflag, size = 0x4, scoped, tag = 'scoped memory for tpu_custom_call.1']
    %9 = vsyncpa [#allocation3], 0
    %s10 = scalar_lea.sflag [#allocation3], 1
    %11 = vsyncpa %s10, 0
    %12 = vsyncpa [#allocation5], 0
    loop: start=0, step=1, limit=4
    $region2: #{tpu_custom_call.1} parent=1 // loop_pre_header
      _
    $region3: #{tpu_custom_call.1} parent=1 // loop_header
      %s14 = sphi 0, %s18
      %p15 = scmp.ge.s32.totalorder %s14, 4
      %s21 = sphi 0, %s33
      %s22 = sphi 0, %s29
      %s23 = sphi 0, %s21
      %s24 = sphi 0, %s22
      %s25 = sphi 0, %s23
      %s26 = sphi 0, %s24
      %s38 = sphi 0, %s40
      %s41 = sphi 0, %s38
      %s42 = sphi 0, %s41
      %s58 = sphi 0, %s42
      %s62 = sphi 0, %s62
      %s64 = sphi 0, %s62
      %s65 = sphi 0, %s64
      %s79 = sphi 0, %s65
      %s85 = sphi 0, %s87
      %s88 = sphi 0, %s85
      %s89 = sphi 0, %s88
      %s105 = sphi 0, %s89
      %s111 = sphi 0, %s113
      %s114 = sphi 0, %s111
      %s115 = sphi 0, %s114
      %s131 = sphi 0, %s115
    $region4: #{tpu_custom_call.1} parent=1 // loop_header_branch
      %17 = sbr.rel (%p15) target = $region8
    $region5: #{tpu_custom_call.1} parent=1 // loop_body
      %s19 = ssub.s32 %s14, 1
      %s20 = ssub.s32 %s14, 2
      %s27 = sadd.s32 1, %s22
      %p28 = scmp.ge.s32.totalorder %s27, 1
      %s29 = scalar_select %p28, 0, %s27
      %s30 = sadd.s32 1, %s21
      %s31 = scalar_select %p28, %s30, %s21
      %p32 = scmp.ge.s32.totalorder %s31, 2
      %s33 = scalar_select %p32, 0, %s31
      %s34 = sadd.s32 %s21, %s22
      %s35 = sadd.s32 %s33, %s29
      %s36 = ssub.s32 %s34, %s35
      %p37 = scmp.eq.s32.totalorder %s36, 0
      %s39 = sadd.s32 %s38, 1
      %s40 = scalar_select %p37, %s38, %s39
      %p43 = pneg %p37
      %p44 = scmp.eq.s32.totalorder %s14, 1
      %p45 = por %p43, %p44
      %p46 = scmp.ne.s32.totalorder %s38, %s41
      %p47 = scmp.eq.s32.totalorder %s14, 0
      %p48 = por %p46, %p47
      %p49 = scmp.ne.s32.totalorder %s38, %s41
      %p50 = scmp.eq.s32.totalorder %s19, 1
      %p51 = por %p49, %p50
      %p52 = scmp.ne.s32.totalorder %s41, %s42
      %p53 = scmp.eq.s32.totalorder %s19, 0
      %p54 = por %p52, %p53
      %p55 = scmp.ne.s32.totalorder %s41, %s42
      %p56 = scmp.eq.s32.totalorder %s20, 1
      %p57 = por %p55, %p56
      %p59 = scmp.ne.s32.totalorder %s42, %s58
      %p60 = scmp.eq.s32.totalorder %s20, 0
      %p61 = por %p59, %p60
      %s63 = sadd.s32 %s62, 1
      %p66 = scmp.eq.s32.totalorder %s14, 1
      %p67 = scmp.ne.s32.totalorder %s62, %s64
      %p68 = scmp.eq.s32.totalorder %s14, 0
      %p69 = por %p67, %p68
      %p70 = scmp.ne.s32.totalorder %s62, %s64
      %p71 = scmp.eq.s32.totalorder %s19, 1
      %p72 = por %p70, %p71
      %p73 = scmp.ne.s32.totalorder %s64, %s65
      %p74 = scmp.eq.s32.totalorder %s19, 0
      %p75 = por %p73, %p74
      %p76 = scmp.ne.s32.totalorder %s64, %s65
      %p77 = scmp.eq.s32.totalorder %s20, 1
      %p78 = por %p76, %p77
      %p80 = scmp.ne.s32.totalorder %s65, %s79
      %p81 = scmp.eq.s32.totalorder %s20, 0
      %p82 = por %p80, %p81
      %s83 = ssub.s32 %s21, %s33
      %p84 = scmp.eq.s32.totalorder %s83, 0
      %s86 = sadd.s32 %s85, 1
      %s87 = scalar_select %p84, %s85, %s86
      %p90 = pneg %p84
      %p91 = scmp.eq.s32.totalorder %s14, 1
      %p92 = por %p90, %p91
      %p93 = scmp.ne.s32.totalorder %s85, %s88
      %p94 = scmp.eq.s32.totalorder %s14, 0
      %p95 = por %p93, %p94
      %p96 = scmp.ne.s32.totalorder %s85, %s88
      %p97 = scmp.eq.s32.totalorder %s19, 1
      %p98 = por %p96, %p97
      %p99 = scmp.ne.s32.totalorder %s88, %s89
      %p100 = scmp.eq.s32.totalorder %s19, 0
      %p101 = por %p99, %p100
      %p102 = scmp.ne.s32.totalorder %s88, %s89
      %p103 = scmp.eq.s32.totalorder %s20, 1
      %p104 = por %p102, %p103
      %p106 = scmp.ne.s32.totalorder %s89, %s105
      %p107 = scmp.eq.s32.totalorder %s20, 0
      %p108 = por %p106, %p107
      %s109 = ssub.s32 %s21, %s33
      %p110 = scmp.eq.s32.totalorder %s109, 0
      %s112 = sadd.s32 %s111, 1
      %s113 = scalar_select %p110, %s111, %s112
      %p116 = pneg %p110
      %p117 = scmp.eq.s32.totalorder %s14, 1
      %p118 = por %p116, %p117
      %p119 = scmp.ne.s32.totalorder %s111, %s114
      %p120 = scmp.eq.s32.totalorder %s14, 0
      %p121 = por %p119, %p120
      %p122 = scmp.ne.s32.totalorder %s111, %s114
      %p123 = scmp.eq.s32.totalorder %s19, 1
      %p124 = por %p122, %p123
      %p125 = scmp.ne.s32.totalorder %s114, %s115
      %p126 = scmp.eq.s32.totalorder %s19, 0
      %p127 = por %p125, %p126
      %p128 = scmp.ne.s32.totalorder %s114, %s115
      %p129 = scmp.eq.s32.totalorder %s20, 1
      %p130 = por %p128, %p129
      %p132 = scmp.ne.s32.totalorder %s115, %s131
      %p133 = scmp.eq.s32.totalorder %s20, 0
      %p134 = por %p132, %p133
      %p135 = scmp.le.s32.totalorder 1, %s14
      %p136 = scmp.lt.s32.totalorder %s14, 3
      %p137 = pnand %p135, %p136
      %p138 = pneg %p137
      // Predicated region
      $region9: #{tpu_custom_call.1} parent=5 // pred_check
        _
      $region10: #{tpu_custom_call.1} parent=5 // pred_check_branch
        %140 = sbr.rel (%p137) target = $region12
      $region11: #{tpu_custom_call.1} parent=5 // pred_region
        %s141 = ssub.s32 %s14, 1
        // Predicated region
        $region13: #{tpu_custom_call.1} parent=11 // pred_check
          %p142 = pneg %p75
        $region14: #{tpu_custom_call.1} parent=11 // pred_check_branch
          %144 = sbr.rel (%p142) target = $region16
        $region15: #{tpu_custom_call.1} parent=11 // pred_region
          %s146 = ssub.s32 128, 128
          %147 = vsyncadd [#allocation5], %s146
          %s149 = sshll.u32 [#allocation4], 4
          %s150 = int_to_ptr.vmem [resolvable:$true] %s149
          %152 = dma.hbm_to_vmem [thread:$0]  %s1, 128, %s150, [#allocation5]
        $region16: #{tpu_custom_call.1} parent=11 // pred_fallthru
          _
      $region12: #{tpu_custom_call.1} parent=5 // pred_fallthru
        _
      %p153 = scmp.lt.s32.totalorder %s14, 2
      // Predicated region
      $region17: #{tpu_custom_call.1} parent=5 // pred_check
        %p154 = pneg %p153
      $region18: #{tpu_custom_call.1} parent=5 // pred_check_branch
        %156 = sbr.rel (%p154) target = $region20
      $region19: #{tpu_custom_call.1} parent=5 // pred_region
        // Predicated region
        $region21: #{tpu_custom_call.1} parent=19 // pred_check
          %p157 = pneg %p48
        $region22: #{tpu_custom_call.1} parent=19 // pred_check_branch
          %159 = sbr.rel (%p157) target = $region24
        $region23: #{tpu_custom_call.1} parent=19 // pred_region
          %s160 = sand.u32 %s38, 1
          %s161 = scalar_lea.sflag [#allocation3], %s160
          %s162 = sand.u32 %s38, 1
          %s163 = smul.addr %s162, 16
          %s164 = scalar_lea.vmem [#allocation2], %s163
          %s165 = sadd.s32 %s21, %s22
          %s167 = ssub.s32 256, 256
          %168 = vsyncadd %s161, %s167
          %s169 = smul.addr %s165, 4
          %s170 = smul.addr %s169, 64
          %s171 = scalar_lea.hbm %s0, %s170
          %s172 = sshll.u32 %s164, 4
          %s173 = int_to_ptr.vmem [resolvable:$true] %s172
          %178 = dma.hbm_to_vmem [thread:$0]  %s171, 256, %s173, %s161, 128, 128, 8
        $region24: #{tpu_custom_call.1} parent=19 // pred_fallthru
          _
      $region20: #{tpu_custom_call.1} parent=5 // pred_fallthru
        _
      %p179 = scmp.le.s32.totalorder 1, %s14
      %p180 = scmp.lt.s32.totalorder %s14, 3
      %p181 = pnand %p179, %p180
      %p182 = pneg %p181
      // Predicated region
      $region25: #{tpu_custom_call.1} parent=5 // pred_check
        _
      $region26: #{tpu_custom_call.1} parent=5 // pred_check_branch
        %184 = sbr.rel (%p181) target = $region28
      $region27: #{tpu_custom_call.1} parent=5 // pred_region
        %s185 = ssub.s32 %s14, 1
        %s186 = sand.u32 %s41, 1
        %s187 = scalar_lea.sflag [#allocation3], %s186
        %s188 = sand.u32 %s41, 1
        %s189 = smul.addr %s188, 16
        %s190 = scalar_lea.vmem [#allocation2], %s189
        // Predicated region
        $region29: #{tpu_custom_call.1} parent=27 // pred_check
          %p191 = pneg %p54
        $region30: #{tpu_custom_call.1} parent=27 // pred_check_branch
          %193 = sbr.rel (%p191) target = $region32
        $region31: #{tpu_custom_call.1} parent=27 // pred_region
          %194 = dma.done %s187, 256
        $region32: #{tpu_custom_call.1} parent=27 // pred_fallthru
          _
        // Predicated region
        $region33: #{tpu_custom_call.1} parent=27 // pred_check
          %p195 = pneg %p75
        $region34: #{tpu_custom_call.1} parent=27 // pred_check_branch
          %197 = sbr.rel (%p195) target = $region36
        $region35: #{tpu_custom_call.1} parent=27 // pred_region
          %198 = dma.done [#allocation5], 128
        $region36: #{tpu_custom_call.1} parent=27 // pred_fallthru
          _
        %s199 = sand.u32 %s41, 1
        %s200 = scalar_lea.sflag [#allocation3], %s199
        %s201 = sand.u32 %s41, 1
        %s202 = smul.addr %s201, 16
        %s203 = scalar_lea.vmem [#allocation2], %s202
        %p204 = pneg %p54
        %p205 = pneg %p51
        %p206 = pneg %p75
        %p207 = pneg %p72
        %p208 = pneg %p101
        %p209 = pneg %p98
        %p210 = scmp.lt.s32.totalorder %s23, 1
        %s211 = scalar_select %p210, %s23, 1
        %s212 = smul.addr %s211, 8
        %s213 = scalar_lea.vmem %s2, %s212
        %p214 = pneg %p127
        %p215 = pneg %p124
        %p216 = scmp.lt.s32.totalorder %s23, 1
        %s217 = scalar_select %p216, %s23, 1
        %s218 = smul.addr %s217, 8
        %s219 = scalar_lea.vmem %s3, %s218
        %s220 = sadd.s32 %s23, %s24
        %p221 = scmp.lt.s32.totalorder %s23, 1
        %s222 = scalar_select %p221, %s23, 1
        %s223 = smul.addr %s222, 8
        %s224 = scalar_lea.vmem %s2, %s223
        %p225 = scmp.lt.s32.totalorder %s23, 1
        %s226 = scalar_select %p225, %s23, 1
        %s227 = smul.addr %s226, 8
        %s228 = scalar_lea.vmem %s3, %s227
        %p229 = scmp.eq.s32.totalorder %s24, 0
        // Predicated region
        $region37: #{tpu_custom_call.1} parent=27 // pred_check
          %p230 = pneg %p229
        $region38: #{tpu_custom_call.1} parent=27 // pred_check_branch
          %232 = sbr.rel (%p230) target = $region40
        $region39: #{tpu_custom_call.1} parent=27 // pred_region
          %vm233 = vcmask 7168
          %234 = vst.msk [vmem:[%s224] sm:$0xff] %vm233, 0.0
          %235 = vst.msk [vmem:[%s228] sm:$0xff] %vm233, 0.0
        $region40: #{tpu_custom_call.1} parent=27 // pred_fallthru
          _
        %v236 = vld [vmem:[%s190] sm:$0xff]
        %v237 = vld [vmem:[%s190 + $0x8] sm:$0xff]
        %v239 = vcombine.high %v236, %v236
        %240 = vrot.lane.b32.xlu0 %v236, 127
        %v241 = vpop.permute.xlu0 %240
        %242 = vrot.lane.b32.xlu0 %v239, 127
        %v243 = vpop.permute.xlu0 %242
        %vm244 = vcmask 1039360
        %v245 = vsel %vm244, %v241, %v243
        %v247 = vcombine.high %v237, %v237
        %248 = vrot.lane.b32.xlu0 %v237, 127
        %v249 = vpop.permute.xlu0 %248
        %250 = vrot.lane.b32.xlu0 %v247, 127
        %v251 = vpop.permute.xlu0 %250
        %v252 = vsel %vm244, %v249, %v251
        %v253 = vrot.slane %v237, 4
        %v254 = vrot.slane %v245, 4
        %vm257 = vcmask 1043456
        %v258 = vsel %vm257, %v236, %v253
        %v259 = vsel %vm257, %v237, %v254
        %v260 = vld [vmem:[#allocation4] sm:$0xff]
        %vm261 = vcmask 97280
        %v263 = vsel %vm261, %v260, 0
        %v265 = vsel %vm257, %v245, 0
        %v267 = vsel %vm257, %v252, 0
        %269 = vmatprep.subr.mxu0 %v259
        %270 = vmatpush1.msra.mxu0 %v258
        %271 = vmatprep.subr.mxu0 %v267
        %272 = vmatpush1.msra.mxu0 %v265
        %273 = vmatprep.subr.mxu0 0.0
        %274 = vmatpush1.msra.mxu0 0.0
        %275 = vmatprep.subr.mxu0 0.0
        %276 = vmatpush1.msra.mxu0 0.0
        %277 = vmatprep.subr.mxu0 0.0
        %278 = vmatpush1.msra.mxu0 0.0
        %279 = vmatprep.subr.mxu0 0.0
        %280 = vmatpush1.msra.mxu0 0.0
        %281 = vmatprep.subr.mxu0 0.0
        %282 = vmatpush1.msra.mxu0 0.0
        %283 = vmatprep.subr.mxu0 0.0
        %284 = vmatpush1.msra.mxu0 0.0
        %285 = vmatprep.subr.mxu0 0.0
        %286 = vmatpush1.msra.mxu0 0.0
        %287 = vmatprep.subr.mxu0 0.0
        %288 = vmatpush1.msra.mxu0 0.0
        %289 = vmatprep.subr.mxu0 0.0
        %290 = vmatpush1.msra.mxu0 0.0
        %291 = vmatprep.subr.mxu0 0.0
        %292 = vmatpush1.msra.mxu0 0.0
        %293 = vmatprep.subr.mxu0 0.0
        %294 = vmatpush1.msra.mxu0 0.0
        %295 = vmatprep.subr.mxu0 0.0
        %296 = vmatpush1.msra.mxu0 0.0
        %297 = vmatprep.subr.mxu0 0.0
        %298 = vmatpush1.msra.mxu0 0.0
        %299 = vmatprep.subr.mxu0 0.0
        %300 = vmatpush1.msra.mxu0 0.0
        %301 = vmatprep.subr.mxu0 0.0
        %302 = vmatpush1.msra.mxu0 0.0
        %303 = vmatprep.subr.mxu0 0.0
        %304 = vmatpush1.msra.mxu0 0.0
        %305 = vmatprep.subr.mxu0 0.0
        %306 = vmatpush1.msra.mxu0 0.0
        %307 = vmatprep.subr.mxu0 0.0
        %308 = vmatpush1.msra.mxu0 0.0
        %309 = vmatprep.subr.mxu0 0.0
        %310 = vmatpush1.msra.mxu0 0.0
        %311 = vmatprep.subr.mxu0 0.0
        %312 = vmatpush1.msra.mxu0 0.0
        %313 = vmatprep.subr.mxu0 0.0
        %314 = vmatpush1.msra.mxu0 0.0
        %315 = vmatprep.subr.mxu0 0.0
        %316 = vmatpush1.msra.mxu0 0.0
        %317 = vmatprep.subr.mxu0 0.0
        %318 = vmatpush1.msra.mxu0 0.0
        %319 = vmatprep.subr.mxu0 0.0
        %320 = vmatpush1.msra.mxu0 0.0
        %321 = vmatprep.subr.mxu0 0.0
        %322 = vmatpush1.msra.mxu0 0.0
        %323 = vmatprep.subr.mxu0 0.0
        %324 = vmatpush1.msra.mxu0 0.0
        %325 = vmatprep.subr.mxu0 0.0
        %326 = vmatpush1.msra.mxu0 0.0
        %327 = vmatprep.subr.mxu0 0.0
        %328 = vmatpush1.msra.mxu0 0.0
        %329 = vmatprep.subr.mxu0 0.0
        %330 = vmatpush1.msra.mxu0 0.0
        %331 = vmatprep.subr.mxu0 0.0
        %332 = vmatpush1.msra.mxu0 0.0
        %333 = vmatprep.mubr.f32.mxu0 0.0
        %334 = vmatmul.mubr.f32.gmra.mrb[0].mxu0 %v263
        %v335 = vpop.f32.mrb[0].mxu0
        %v336 = vadd.f32 0.0, %v335
        %v337 = vpop.f32.mrb[0].mxu0
        %v338 = vadd.f32 0.0, %v337
        %339 = vdwg.mxu0
        %v340 = vlaneseq
        %v341 = vand.u32 %v340, 127
        %vm342 = vcmp.lt.s32.totalorder %v341, 8
        %v343 = vsel %vm342, 1, 0
        %vm344 = vcmp.eq.s32.totalorder %v343, 1
        %v345 = vsel %vm344, %v336, 0.0
        %v346 = vsel %vm344, %v338, 0.0
        %v347 = vld [vmem:[%s224] sm:$0xff]
        %v348 = vadd.f32 %v345, %v346
        %349 = vadd.xlane.f32.xlu0 %v348
        %v350 = vpop.xlane.xlu0 %349
        %v351 = vadd.f32 %v347, %v350
        %vm352 = vcmask 7168
        %353 = vst.msk [vmem:[%s224] sm:$0xff] %vm352, %v351
        %v354 = vld [vmem:[%s228] sm:$0xff]
        %v355 = vmul.f32 %v345, %v345
        %v356 = vmul.f32 %v346, %v346
        %v357 = vadd.f32 %v355, %v356
        %358 = vadd.xlane.f32.xlu0 %v357
        %v359 = vpop.xlane.xlu0 %358
        %v360 = vadd.f32 %v354, %v359
        %361 = vst.msk [vmem:[%s228] sm:$0xff] %vm352, %v360
        %p362 = scmp.lt.s32.totalorder %s23, 1
        %s363 = scalar_select %p362, %s23, 1
        %s364 = smul.addr %s363, 8
        %s365 = scalar_lea.vmem %s2, %s364
        %p366 = scmp.lt.s32.totalorder %s23, 1
        %s367 = scalar_select %p366, %s23, 1
        %s368 = smul.addr %s367, 8
        %s369 = scalar_lea.vmem %s3, %s368
        // Predicated region
        $region41: #{tpu_custom_call.1} parent=27 // pred_check
          %p370 = pneg %p98
        $region42: #{tpu_custom_call.1} parent=27 // pred_check_branch
          %372 = sbr.rel (%p370) target = $region44
        $region43: #{tpu_custom_call.1} parent=27 // pred_region
          _
        $region44: #{tpu_custom_call.1} parent=27 // pred_fallthru
          _
        // Predicated region
        $region45: #{tpu_custom_call.1} parent=27 // pred_check
          %p373 = pneg %p124
        $region46: #{tpu_custom_call.1} parent=27 // pred_check_branch
          %375 = sbr.rel (%p373) target = $region48
        $region47: #{tpu_custom_call.1} parent=27 // pred_region
          _
        $region48: #{tpu_custom_call.1} parent=27 // pred_fallthru
          _
      $region28: #{tpu_custom_call.1} parent=5 // pred_fallthru
        _
      %p376 = scmp.le.s32.totalorder 2, %s14
      // Predicated region
      $region49: #{tpu_custom_call.1} parent=5 // pred_check
        %p377 = pneg %p376
      $region50: #{tpu_custom_call.1} parent=5 // pred_check_branch
        %379 = sbr.rel (%p377) target = $region52
      $region51: #{tpu_custom_call.1} parent=5 // pred_region
        %s380 = ssub.s32 %s14, 2
        // Predicated region
        $region53: #{tpu_custom_call.1} parent=51 // pred_check
          %p381 = pneg %p104
        $region54: #{tpu_custom_call.1} parent=51 // pred_check_branch
          %383 = sbr.rel (%p381) target = $region56
        $region55: #{tpu_custom_call.1} parent=51 // pred_region
          %p384 = scmp.lt.s32.totalorder %s25, 1
          %s385 = scalar_select %p384, %s25, 1
          %s386 = smul.addr %s385, 8
          %s387 = scalar_lea.vmem %s2, %s386
        $region56: #{tpu_custom_call.1} parent=51 // pred_fallthru
          _
        // Predicated region
        $region57: #{tpu_custom_call.1} parent=51 // pred_check
          %p388 = pneg %p130
        $region58: #{tpu_custom_call.1} parent=51 // pred_check_branch
          %390 = sbr.rel (%p388) target = $region60
        $region59: #{tpu_custom_call.1} parent=51 // pred_region
          %p391 = scmp.lt.s32.totalorder %s25, 1
          %s392 = scalar_select %p391, %s25, 1
          %s393 = smul.addr %s392, 8
          %s394 = scalar_lea.vmem %s3, %s393
        $region60: #{tpu_custom_call.1} parent=51 // pred_fallthru
          _
      $region52: #{tpu_custom_call.1} parent=5 // pred_fallthru
        _
    $region6: #{tpu_custom_call.1} parent=1 // loop_footer
      %s18 = sadd.s32 1, %s14
    $region7: #{tpu_custom_call.1} parent=1 // loop_footer_branch
      %13 = sbr.rel target = $region3
    $region8: #{tpu_custom_call.1} parent=1 // loop_exit
      _
    %395 = vsyncpa [#allocation3], 1
    %s396 = scalar_lea.sflag [#allocation3], 1
    %397 = vsyncpa %s396, 1
    %398 = vsyncpa [#allocation5], 1

</llo_original>
